<compile_context>
chip_gen: v7x
topology: tpu7x:2x2x1
jax: 0.10.0
libtpu: 0.0.40
codegen_flags: <defaults>
</compile_context>

<pallas_src>
import functools

import jax
import jax.numpy as jnp
from jax import lax
from jax.experimental import pallas as pl
from jax.experimental.pallas import tpu as pltpu


# ---------------------------------------------------------------------------
# helpers
# ---------------------------------------------------------------------------

def _round_up(a, b):
    return (a + b - 1) // b * b


def _cdiv(a, b):
    return (a + b - 1) // b


def _sublane_pack(dtype):
    # sub-32-bit dtypes pack 2 (bf16/f16) or 4 (int8/fp8) rows per sublane.
    return 8 * max(1, 4 // jnp.dtype(dtype).itemsize)


def _vmem_limit_bytes():
    try:
        cap = int(pltpu.get_tpu_info().vmem_capacity_bytes)
    except Exception:
        cap = 64 << 20  # conservative fallback (v7x per-TC VMEM)
    # ~3/4 of physical VMEM, capped; leaves headroom for Mosaic scratch.
    return int(min(cap * 3 // 4, 96 << 20))


def _choose_tc(C, pack, chan_bytes_f32, block_budget, target_steps=8):
    """Channel tile: dtype-aware sublane multiple, VMEM-bounded, and small
    enough that the channel grid axis keeps >= target_steps steps when C
    allows it (megacore sharding / pipelining)."""
    if C <= pack:
        return int(C)
    tc_vmem = max(pack, (block_budget // max(chan_bytes_f32, 1)) // pack * pack)
    tc_split = max(pack, _round_up(_cdiv(C, target_steps), pack))
    return int(min(tc_vmem, tc_split, _round_up(C, pack)))


# ---------------------------------------------------------------------------
# kernels
# ---------------------------------------------------------------------------

def _bn_fused_kernel(x_ref, w_ref, b_ref, y_ref, mean_ref, var_ref,
                     *, eps, inv_count, tc):
    """Single-pass training BN for one channel block.

    x_ref : (N, TC, HW)   natural layout, HW on lanes, channels on sublanes
    w_ref : (C_pad, 1)    resident full scale column (constant index_map)
    b_ref : (C_pad, 1)    resident full shift column
    y_ref : (N, TC, HW)
    mean_ref / var_ref : (TC, 1) batch mean and biased batch variance
    """
    c0 = pl.multiple_of(pl.program_id(0) * tc, tc)
    x = x_ref[...].astype(jnp.float32)                       # (N, TC, HW)

    mean = jnp.sum(x, axis=(0, 2), keepdims=True) * inv_count  # (1, TC, 1)
    xc = x - mean
    var = jnp.sum(xc * xc, axis=(0, 2), keepdims=True) * inv_count  # biased
    inv_std = lax.rsqrt(var + eps)                            # EUP

    w = w_ref[pl.ds(c0, tc), :].astype(jnp.float32).reshape(1, tc, 1)
    b = b_ref[pl.ds(c0, tc), :].astype(jnp.float32).reshape(1, tc, 1)

    y_ref[...] = (xc * (w * inv_std) + b).astype(y_ref.dtype)
    mean_ref[...] = mean[0]
    var_ref[...] = var[0]


def _bn_stats_kernel(x_ref, sum_ref, ssq_ref, *, hw, ts):
    """Pass 1 of the chunked path: accumulate per-channel sum / sum-of-squares
    across H*W chunks (the 'arbitrary' grid axis)."""
    s = pl.program_id(1)
    x = x_ref[...].astype(jnp.float32)                        # (N, TC, TS)
    if hw % ts:  # mask pad lanes of the (only) partial last chunk
        lane = lax.broadcasted_iota(jnp.int32, x.shape, 2)
        x = jnp.where(s * ts + lane < hw, x, 0.0)

    psum = jnp.sum(x, axis=(0, 2), keepdims=True)[0]          # (TC, 1)
    pssq = jnp.sum(x * x, axis=(0, 2), keepdims=True)[0]

    @pl.when(s == 0)
    def _():
        sum_ref[...] = psum
        ssq_ref[...] = pssq

    @pl.when(s > 0)
    def _():
        sum_ref[...] += psum
        ssq_ref[...] += pssq


def _bn_apply_kernel(x_ref, scale_ref, shift_ref, y_ref, *, tc):
    """Per-channel affine: y = x * scale[c] + shift[c] (pass 2 / eval mode)."""
    c0 = pl.multiple_of(pl.program_id(0) * tc, tc)
    sc = scale_ref[pl.ds(c0, tc), :].reshape(1, tc, 1)
    sh = shift_ref[pl.ds(c0, tc), :].reshape(1, tc, 1)
    y_ref[...] = (x_ref[...].astype(jnp.float32) * sc + sh).astype(y_ref.dtype)


# ---------------------------------------------------------------------------
# wrappers
# ---------------------------------------------------------------------------

def _pad_col(v, c_pad):
    c = v.shape[0]
    return jnp.pad(v.astype(jnp.float32).reshape(c, 1), ((0, c_pad - c), (0, 0)))


def _spatial_chunk(N, TC, HW, block_budget):
    """Lane-dim chunk: whole row when it fits, else a multiple of 128."""
    if N * TC * HW * 4 <= block_budget or HW <= 128:
        return HW
    # TODO(synk): also tile N for the extreme case where even a 128-lane chunk
    # of all batches exceeds the budget.
    return max(128, (block_budget // (N * TC * 4)) // 128 * 128)


def _apply_affine(x3, scale, shift, TC, vmem_limit, block_budget):
    N, C, HW = x3.shape
    c_blocks = _cdiv(C, TC)
    c_pad = c_blocks * TC
    scale_col = _pad_col(scale, c_pad)
    shift_col = _pad_col(shift, c_pad)
    TS = _spatial_chunk(N, TC, HW, block_budget)
    s_chunks = _cdiv(HW, TS)

    return pl.pallas_call(
        functools.partial(_bn_apply_kernel, tc=TC),
        out_shape=jax.ShapeDtypeStruct((N, C, HW), x3.dtype),
        grid=(c_blocks, s_chunks),
        in_specs=[
            pl.BlockSpec((N, TC, TS), lambda i, s: (0, i, s)),
            pl.BlockSpec((c_pad, 1), lambda i, s: (0, 0)),
            pl.BlockSpec((c_pad, 1), lambda i, s: (0, 0)),
        ],
        out_specs=pl.BlockSpec((N, TC, TS), lambda i, s: (0, i, s)),
        compiler_params=pltpu.CompilerParams(
            dimension_semantics=("parallel", "parallel"),
            vmem_limit_bytes=vmem_limit),
    )(x3, scale_col, shift_col)


def _batch_stats_chunked(x3, TC, vmem_limit, block_budget, S):
    N, C, HW = x3.shape
    c_blocks = _cdiv(C, TC)
    c_pad = c_blocks * TC
    TS = _spatial_chunk(N, TC, HW, block_budget)
    s_chunks = _cdiv(HW, TS)

    sum_c, ssq_c = pl.pallas_call(
        functools.partial(_bn_stats_kernel, hw=HW, ts=TS),
        out_shape=(jax.ShapeDtypeStruct((c_pad, 1), jnp.float32),
                   jax.ShapeDtypeStruct((c_pad, 1), jnp.float32)),
        grid=(c_blocks, s_chunks),
        in_specs=[pl.BlockSpec((N, TC, TS), lambda i, s: (0, i, s))],
        out_specs=(pl.BlockSpec((TC, 1), lambda i, s: (i, 0)),
                   pl.BlockSpec((TC, 1), lambda i, s: (i, 0))),
        compiler_params=pltpu.CompilerParams(
            dimension_semantics=("parallel", "arbitrary"),
            vmem_limit_bytes=vmem_limit),
    )(x3)

    mean = sum_c[:C, 0] * (1.0 / S)
    ex2 = ssq_c[:C, 0] * (1.0 / S)
    var = jnp.maximum(ex2 - mean * mean, 0.0)   # biased
    return mean, var


def meta_batch_norm2d_forward(x, weight, bias, running_mean, running_var,
                              *, eps=1e-5, momentum=0.1, training=True):
    """MetaBatchNorm2d forward.

    training=True (or track_running_stats=False): normalize with batch stats
    and return the momentum-updated running stats (mirrors the in-place buffer
    update of F.batch_norm).  training=False: normalize with running stats.
    Returns (y, new_running_mean, new_running_var).
    """
    N, C, H, W = x.shape
    HW = H * W
    S = N * HW
    x3 = x.reshape(N, C, HW)                     # contiguous, free

    if weight is None:
        weight = jnp.ones((C,), jnp.float32)
    if bias is None:
        bias = jnp.zeros((C,), jnp.float32)

    pack = _sublane_pack(x.dtype)
    vmem_limit = _vmem_limit_bytes()
    block_budget = vmem_limit // 6               # 2x in + 2x out + f32 temps
    chan_bytes_f32 = N * HW * 4
    TC = _choose_tc(C, pack, chan_bytes_f32, block_budget)

    if not training:
        assert running_mean is not None and running_var is not None
        inv_std = lax.rsqrt(running_var.astype(jnp.float32) + eps)
        scale = weight.astype(jnp.float32) * inv_std
        shift = bias.astype(jnp.float32) - running_mean.astype(jnp.float32) * scale
        y3 = _apply_affine(x3, scale, shift, TC, vmem_limit, block_budget)
        return y3.reshape(N, C, H, W), running_mean, running_var

    min_tc = C if C <= pack else pack
    fused_ok = min_tc * chan_bytes_f32 <= block_budget

    if fused_ok:
        # single pass: stats + normalize in one kernel (minimal HBM traffic)
        c_blocks = _cdiv(C, TC)
        c_pad = c_blocks * TC
        w_col = _pad_col(weight, c_pad)
        b_col = _pad_col(bias, c_pad)

        y3, mean_c, var_c = pl.pallas_call(
            functools.partial(_bn_fused_kernel,
                              eps=float(eps), inv_count=1.0 / float(S), tc=TC),
            out_shape=(jax.ShapeDtypeStruct((N, C, HW), x.dtype),
                       jax.ShapeDtypeStruct((c_pad, 1), jnp.float32),
                       jax.ShapeDtypeStruct((c_pad, 1), jnp.float32)),
            grid=(c_blocks,),
            in_specs=[
                pl.BlockSpec((N, TC, HW), lambda i: (0, i, 0)),
                pl.BlockSpec((c_pad, 1), lambda i: (0, 0)),
                pl.BlockSpec((c_pad, 1), lambda i: (0, 0)),
            ],
            out_specs=(pl.BlockSpec((N, TC, HW), lambda i: (0, i, 0)),
                       pl.BlockSpec((TC, 1), lambda i: (i, 0)),
                       pl.BlockSpec((TC, 1), lambda i: (i, 0))),
            compiler_params=pltpu.CompilerParams(
                dimension_semantics=("parallel",),
                vmem_limit_bytes=vmem_limit),
        )(x3, w_col, b_col)
        batch_mean = mean_c[:C, 0]
        batch_var = var_c[:C, 0]
    else:
        # two passes: chunked stats over H*W, then per-channel affine apply
        batch_mean, batch_var = _batch_stats_chunked(
            x3, TC, vmem_limit, block_budget, S)
        inv_std = lax.rsqrt(batch_var + eps)
        scale = weight.astype(jnp.float32) * inv_std
        shift = bias.astype(jnp.float32) - batch_mean * scale
        y3 = _apply_affine(x3, scale, shift, TC, vmem_limit, block_budget)

    y = y3.reshape(N, C, H, W)

    if running_mean is None or running_var is None:
        return y, running_mean, running_var

    if S > 1:
        unbiased = batch_var * (float(S) / float(S - 1))
    else:  # match PyTorch: unbiased variance of a single sample is NaN
        unbiased = jnp.full_like(batch_var, jnp.nan)
    new_rm = (1.0 - momentum) * running_mean + momentum * batch_mean
    new_rv = (1.0 - momentum) * running_var + momentum * unbiased
    return y, new_rm, new_rv


# ---------------------------------------------------------------------------
# pure-JAX references + test
# ---------------------------------------------------------------------------

def reference_train(x, weight, bias, running_mean, running_var,
                    eps=1e-5, momentum=0.1):
    mean = jnp.mean(x, axis=(0, 2, 3))
    var = jnp.var(x, axis=(0, 2, 3))                       # biased
    inv_std = lax.rsqrt(var + eps)
    y = ((x - mean.reshape(1, -1, 1, 1)) * inv_std.reshape(1, -1, 1, 1)
         * weight.reshape(1, -1, 1, 1) + bias.reshape(1, -1, 1, 1))
    n = x.shape[0] * x.shape[2] * x.shape[3]
    new_rm = (1.0 - momentum) * running_mean + momentum * mean
    new_rv = (1.0 - momentum) * running_var + momentum * var * n / (n - 1)
    return y, new_rm, new_rv


def reference_eval(x, weight, bias, running_mean, running_var, eps=1e-5):
    inv_std = lax.rsqrt(running_var + eps)
    return ((x - running_mean.reshape(1, -1, 1, 1)) * inv_std.reshape(1, -1, 1, 1)
            * weight.reshape(1, -1, 1, 1) + bias.reshape(1, -1, 1, 1))


if __name__ == "__main__":
    N, C, H, W = 2, 4, 16, 16
    key = jax.random.PRNGKey(0)
    kx, kw, kb, km, kv = jax.random.split(key, 5)

    x = jax.random.normal(kx, (N, C, H, W), jnp.float32)
    weight = 1.0 + 0.1 * jax.random.normal(kw, (C,), jnp.float32)
    bias = 0.1 * jax.random.normal(kb, (C,), jnp.float32)
    running_mean = 0.05 * jax.random.normal(km, (C,), jnp.float32)
    running_var = 1.0 + 0.1 * jax.random.normal(kv, (C,), jnp.float32) ** 2

    # training mode (batch stats + running-stat update)
    y, rm, rv = meta_batch_norm2d_forward(
        x, weight, bias, running_mean, running_var,
        eps=1e-5, momentum=0.1, training=True)
    y = jax.block_until_ready(y)
    y_ref, rm_ref, rv_ref = reference_train(
        x, weight, bias, running_mean, running_var, eps=1e-5, momentum=0.1)
    assert y.shape == (N, C, H, W)
    assert jnp.allclose(y, y_ref, atol=1e-5, rtol=1e-5)
    assert jnp.allclose(rm, rm_ref, atol=1e-6, rtol=1e-6)
    assert jnp.allclose(rv, rv_ref, atol=1e-5, rtol=1e-5)

    # eval mode (running stats, buffers untouched)
    y_e, rm_e, rv_e = meta_batch_norm2d_forward(
        x, weight, bias, running_mean, running_var,
        eps=1e-5, momentum=0.1, training=False)
    y_e = jax.block_until_ready(y_e)
    y_e_ref = reference_eval(x, weight, bias, running_mean, running_var, eps=1e-5)
    assert jnp.allclose(y_e, y_e_ref, atol=1e-5, rtol=1e-5)
    assert jnp.allclose(rm_e, running_mean) and jnp.allclose(rv_e, running_var)

    print("KERNEL_OK")
</pallas_src>

<mosaic_0001>
module attributes {stable_mosaic.version = 11 : i64} {
  func.func @_bn_fused_kernel(%arg0: i32, %arg1: memref<2x4x256xf32, #tpu.memory_space<vmem>>, %arg2: memref<4x1xf32, #tpu.memory_space<vmem>>, %arg3: memref<4x1xf32, #tpu.memory_space<vmem>>, %arg4: memref<2x4x256xf32, #tpu.memory_space<vmem>>, %arg5: memref<4x1xf32, #tpu.memory_space<vmem>>, %arg6: memref<4x1xf32, #tpu.memory_space<vmem>>) attributes {dimension_semantics = [#tpu.dimension_semantics<parallel>], iteration_bounds = array<i64: 1>, scalar_prefetch = 0 : i64, scratch_operands = 0 : i64, tpu.core_type = #tpu.core_type<tc>, window_params = [{transform_indices = @transform_0, window_bounds = array<i64: 2, 4, 256>}, {pipeline_mode = #tpu.pipeline_mode<synchronous>, transform_indices = @transform_1, window_bounds = array<i64: 4, 1>}, {pipeline_mode = #tpu.pipeline_mode<synchronous>, transform_indices = @transform_2, window_bounds = array<i64: 4, 1>}, {transform_indices = @transform_3, window_bounds = array<i64: 2, 4, 256>}, {transform_indices = @transform_4, window_bounds = array<i64: 4, 1>}, {transform_indices = @transform_5, window_bounds = array<i64: 4, 1>}]} {
    %c4_i32 = arith.constant 4 : i32
    %0 = arith.muli %arg0, %c4_i32 : i32
    %1 = tpu.assume_multiple %0, 4 : i32
    %c0 = arith.constant 0 : index
    %c0_0 = arith.constant 0 : index
    %c0_1 = arith.constant 0 : index
    %2 = vector.load %arg1[%c0, %c0_0, %c0_1] : memref<2x4x256xf32, #tpu.memory_space<vmem>>, vector<2x4x256xf32>
    %cst = arith.constant dense<0.000000e+00> : vector<4xf32>
    %3 = vector.multi_reduction <add>, %2, %cst [0, 2] : vector<2x4x256xf32> to vector<4xf32>
    %4 = vector.shape_cast %3 : vector<4xf32> to vector<1x4x1xf32>
    %cst_2 = arith.constant 0.001953125 : f32
    %5 = vector.broadcast %cst_2 : f32 to vector<1x4x1xf32>
    %6 = arith.mulf %4, %5 : vector<1x4x1xf32>
    %7 = vector.broadcast %6 : vector<1x4x1xf32> to vector<2x4x256xf32>
    %8 = arith.subf %2, %7 : vector<2x4x256xf32>
    %9 = arith.mulf %8, %8 : vector<2x4x256xf32>
    %cst_3 = arith.constant dense<0.000000e+00> : vector<4xf32>
    %10 = vector.multi_reduction <add>, %9, %cst_3 [0, 2] : vector<2x4x256xf32> to vector<4xf32>
    %11 = vector.shape_cast %10 : vector<4xf32> to vector<1x4x1xf32>
    %cst_4 = arith.constant 0.001953125 : f32
    %12 = vector.broadcast %cst_4 : f32 to vector<1x4x1xf32>
    %13 = arith.mulf %11, %12 : vector<1x4x1xf32>
    %cst_5 = arith.constant 9.99999974E-6 : f32
    %14 = vector.broadcast %cst_5 : f32 to vector<1x4x1xf32>
    %15 = arith.addf %13, %14 : vector<1x4x1xf32>
    %16 = math.rsqrt %15 : vector<1x4x1xf32>
    %17 = arith.index_cast %1 : i32 to index
    %c0_6 = arith.constant 0 : index
    %18 = vector.load %arg2[%17, %c0_6] : memref<4x1xf32, #tpu.memory_space<vmem>>, vector<4x1xf32>
    %19 = vector.shape_cast %18 : vector<4x1xf32> to vector<1x4x1xf32>
    %20 = arith.index_cast %1 : i32 to index
    %c0_7 = arith.constant 0 : index
    %21 = vector.load %arg3[%20, %c0_7] : memref<4x1xf32, #tpu.memory_space<vmem>>, vector<4x1xf32>
    %22 = vector.shape_cast %21 : vector<4x1xf32> to vector<1x4x1xf32>
    %23 = arith.mulf %19, %16 : vector<1x4x1xf32>
    %24 = vector.broadcast %23 : vector<1x4x1xf32> to vector<2x4x256xf32>
    %25 = arith.mulf %8, %24 : vector<2x4x256xf32>
    %26 = vector.broadcast %22 : vector<1x4x1xf32> to vector<2x4x256xf32>
    %27 = arith.addf %25, %26 : vector<2x4x256xf32>
    %c0_8 = arith.constant 0 : index
    %c0_9 = arith.constant 0 : index
    %c0_10 = arith.constant 0 : index
    %28 = vector.load %arg4[%c0_8, %c0_9, %c0_10] : memref<2x4x256xf32, #tpu.memory_space<vmem>>, vector<2x4x256xf32>
    tpu.vector_store %arg4[%c0_8, %c0_9, %c0_10], %27 {strides = array<i32>} : memref<2x4x256xf32, #tpu.memory_space<vmem>>, vector<2x4x256xf32>,
    %29 = vector.shape_cast %6 : vector<1x4x1xf32> to vector<4x1xf32>
    %c0_11 = arith.constant 0 : index
    %c0_12 = arith.constant 0 : index
    %30 = vector.load %arg5[%c0_11, %c0_12] : memref<4x1xf32, #tpu.memory_space<vmem>>, vector<4x1xf32>
    tpu.vector_store %arg5[%c0_11, %c0_12], %29 {strides = array<i32>} : memref<4x1xf32, #tpu.memory_space<vmem>>, vector<4x1xf32>,
    %31 = vector.shape_cast %13 : vector<1x4x1xf32> to vector<4x1xf32>
    %c0_13 = arith.constant 0 : index
    %c0_14 = arith.constant 0 : index
    %32 = vector.load %arg6[%c0_13, %c0_14] : memref<4x1xf32, #tpu.memory_space<vmem>>, vector<4x1xf32>
    tpu.vector_store %arg6[%c0_13, %c0_14], %31 {strides = array<i32>} : memref<4x1xf32, #tpu.memory_space<vmem>>, vector<4x1xf32>,
    return
  }
  func.func @transform_0(%arg0: i32) -> (i32, i32, i32) {
    %c0_i32 = arith.constant 0 : i32
    %c0_i32_0 = arith.constant 0 : i32
    %c0_i32_1 = arith.constant 0 : i32
    return %c0_i32, %arg0, %c0_i32_0 : i32, i32, i32
  }
  func.func @transform_1(%arg0: i32) -> (i32, i32) {
    %c0_i32 = arith.constant 0 : i32
    %c0_i32_0 = arith.constant 0 : i32
    %c0_i32_1 = arith.constant 0 : i32
    return %c0_i32, %c0_i32_0 : i32, i32
  }
  func.func @transform_2(%arg0: i32) -> (i32, i32) {
    %c0_i32 = arith.constant 0 : i32
    %c0_i32_0 = arith.constant 0 : i32
    %c0_i32_1 = arith.constant 0 : i32
    return %c0_i32, %c0_i32_0 : i32, i32
  }
  func.func @transform_3(%arg0: i32) -> (i32, i32, i32) {
    %c0_i32 = arith.constant 0 : i32
    %c0_i32_0 = arith.constant 0 : i32
    %c0_i32_1 = arith.constant 0 : i32
    return %c0_i32, %arg0, %c0_i32_0 : i32, i32, i32
  }
  func.func @transform_4(%arg0: i32) -> (i32, i32) {
    %c0_i32 = arith.constant 0 : i32
    %c0_i32_0 = arith.constant 0 : i32
    return %arg0, %c0_i32 : i32, i32
  }
  func.func @transform_5(%arg0: i32) -> (i32, i32) {
    %c0_i32 = arith.constant 0 : i32
    %c0_i32_0 = arith.constant 0 : i32
    return %arg0, %c0_i32 : i32, i32
  }
}

</mosaic_0001>

<llo_original>
// kernel: tpu_custom_call.1
$region0: #{tpu_custom_call.1}
  #allocation0 [shape = 'u32[]', space=smem, size = 0x4, offset = 0x4, fixed_abs, tag = 'smem constant byte address 0x4 - core index']
  #allocation1 [shape = 'u32[144,128]{1,0:T(1,128)}', space=vmem, size = 0x12000, scoped, tag = 'internal scratch']
  %s0 = inlined_call_operand.hbm [shape: f32[2,4,256], index: 0, kind: input, shape index: {}]
  %s1 = inlined_call_operand.vmem [shape: f32[4,1], index: 1, kind: input, shape index: {}]
  %s2 = inlined_call_operand.vmem [shape: f32[4,1], index: 2, kind: input, shape index: {}]
  %s3 = inlined_call_operand.hbm [shape: f32[2,4,256], index: 3, kind: output, shape index: {0}]
  %s4 = inlined_call_operand.vmem [shape: f32[4,1], index: 4, kind: output, shape index: {1}]
  %s5 = inlined_call_operand.vmem [shape: f32[4,1], index: 5, kind: output, shape index: {2}]
  %6 = xla_tuple %s3, %s4, %s5
  %s7 = sld [smem:[#allocation0]]
  $region42: #{tpu_custom_call.1} parent=0
    _
  %s9 = ssub.s32 1, %s7
  %s10 = scalar_select 0, %s9, %s7
  $region1: #{tpu_custom_call.1} parent=0
    #allocation2 [shape = 'u8[8192]{0}', space=vmem, size = 0x2000, scoped, tag = 'input window, operand 0, single buffered']
    #allocation3 [shape = 's32[1]{0}', space=sflag, size = 0x4, scoped, tag = 'scoped memory for tpu_custom_call.1']
    #allocation4 [shape = 's32[1]{0}', space=sflag, size = 0x4, scoped, tag = 'scoped memory for tpu_custom_call.1']
    #allocation5 [shape = 'u8[8192]{0}', space=vmem, size = 0x2000, scoped, tag = 'output window, operand 0, single buffered']
    %11 = vsyncpa [#allocation3], 0
    %12 = vsyncpa [#allocation4], 0
    // Predicated region
    $region2: #{tpu_custom_call.1} parent=1 // pred_check
      _
    $region3: #{tpu_custom_call.1} parent=1 // pred_check_branch
      %14 = sbr.rel (0) target = $region5
    $region4: #{tpu_custom_call.1} parent=1 // pred_region
      %s16 = ssub.s32 256, 256
      %17 = vsyncadd [#allocation3], %s16
      %s18 = sshll.u32 [#allocation2], 4
      %s19 = int_to_ptr.vmem [resolvable:$true] %s18
      %24 = dma.hbm_to_vmem [thread:$0]  %s0, 256, %s19, [#allocation3], 128, 128, 8
    $region5: #{tpu_custom_call.1} parent=1 // pred_fallthru
      _
    // Predicated region
    $region6: #{tpu_custom_call.1} parent=1 // pred_check
      _
    $region7: #{tpu_custom_call.1} parent=1 // pred_check_branch
      %26 = sbr.rel (0) target = $region9
    $region8: #{tpu_custom_call.1} parent=1 // pred_region
      _
    $region9: #{tpu_custom_call.1} parent=1 // pred_fallthru
      _
    // Predicated region
    $region10: #{tpu_custom_call.1} parent=1 // pred_check
      _
    $region11: #{tpu_custom_call.1} parent=1 // pred_check_branch
      %28 = sbr.rel (0) target = $region13
    $region12: #{tpu_custom_call.1} parent=1 // pred_region
      _
    $region13: #{tpu_custom_call.1} parent=1 // pred_fallthru
      _
    // Predicated region
    $region14: #{tpu_custom_call.1} parent=1 // pred_check
      _
    $region15: #{tpu_custom_call.1} parent=1 // pred_check_branch
      %30 = sbr.rel (0) target = $region17
    $region16: #{tpu_custom_call.1} parent=1 // pred_region
      %31 = dma.done [#allocation3], 256
    $region17: #{tpu_custom_call.1} parent=1 // pred_fallthru
      _
    %s32 = smul.u32 0, 4
    %v33 = vld [vmem:[#allocation2] sm:$0xff]
    %v34 = vld [vmem:[#allocation2 + $0x8] sm:$0xff]
    %v37 = vcombine.high %v33, %v33
    %v38 = vcombine.high %v34, %v34
    %vm41 = vcmask 1043456
    %v42 = vsel %vm41, %v33, 0.0
    %v43 = vsel %vm41, %v37, 0.0
    %v44 = vadd.f32 %v42, %v43
    %v45 = vsel %vm41, %v34, 0.0
    %v46 = vadd.f32 %v44, %v45
    %v47 = vsel %vm41, %v38, 0.0
    %v48 = vadd.f32 %v46, %v47
    %49 = vadd.xlane.f32.xlu0 %v48
    %v50 = vpop.xlane.xlu0 %49
    %v51 = vmul.f32 %v50, 0.001953125
    %v54 = vunpack.c.l.s4 839922192
    %v55 = vunpack.c.0.s8 %v54
    %v56 = vlaneseq
    %v57 = vshrl.u32 %v56, 7
    %v58 = vsub.s32 %v55, %v57
    %v59 = vrot.slane %v51, %v58
    %v61 = vsub.f32 %v33, %v59
    %v62 = vsub.f32 %v34, %v59
    %v63 = vmul.f32 %v61, %v61
    %v64 = vmul.f32 %v62, %v62
    %v67 = vcombine.high %v63, %v63
    %v68 = vcombine.high %v64, %v64
    %v71 = vsel %vm41, %v63, 0.0
    %v72 = vsel %vm41, %v67, 0.0
    %v73 = vadd.f32 %v71, %v72
    %v74 = vsel %vm41, %v64, 0.0
    %v75 = vadd.f32 %v73, %v74
    %v76 = vsel %vm41, %v68, 0.0
    %v77 = vadd.f32 %v75, %v76
    %78 = vadd.xlane.f32.xlu0 %v77
    %v79 = vpop.xlane.xlu0 %78
    %v80 = vmul.f32 %v79, 0.001953125
    %v81 = vadd.f32 %v80, 1e-05
    %v82 = vrsqrt.pop %v81
    %s83 = scalar_lea.vmem %s1, %s32
    %v84 = vld [vmem:[%s83] sm:$0xf]
    %s85 = scalar_lea.vmem %s2, %s32
    %v86 = vld [vmem:[%s85] sm:$0xf]
    %v87 = vmul.f32 %v84, %v82
    %89 = vset.pattern.permute.xlu0 0
    %90 = vperm.xlu0 %89, %v87
    %v91 = vpop.permute.xlu0 %90
    %v93 = vunpack.c.l.s4 839922192
    %v94 = vunpack.c.0.s8 %v93
    %v95 = vlaneseq
    %v96 = vshrl.u32 %v95, 7
    %v97 = vsub.s32 %v94, %v96
    %v98 = vrot.slane %v91, %v97
    %v100 = vmul.f32 %v61, %v98
    %v101 = vmul.f32 %v62, %v98
    %103 = vset.pattern.permute.xlu0 0
    %104 = vperm.xlu0 %103, %v86
    %v105 = vpop.permute.xlu0 %104
    %v107 = vunpack.c.l.s4 839922192
    %v108 = vunpack.c.0.s8 %v107
    %v109 = vlaneseq
    %v110 = vshrl.u32 %v109, 7
    %v111 = vsub.s32 %v108, %v110
    %v112 = vrot.slane %v105, %v111
    %v114 = vadd.f32 %v100, %v112
    %v115 = vadd.f32 %v101, %v112
    %116 = vst [vmem:[#allocation5] sm:$0xff] %v114
    %117 = vst [vmem:[#allocation5 + $0x8] sm:$0xff] %v115
    %vm118 = vcmask 3072
    %119 = vst.msk [vmem:[%s4] sm:$0xf] %vm118, %v51
    %120 = vst.msk [vmem:[%s5] sm:$0xf] %vm118, %v80
    // Predicated region
    $region18: #{tpu_custom_call.1} parent=1 // pred_check
      _
    $region19: #{tpu_custom_call.1} parent=1 // pred_check_branch
      %122 = sbr.rel (0) target = $region21
    $region20: #{tpu_custom_call.1} parent=1 // pred_region
      %s124 = ssub.s32 256, 256
      %125 = vsyncadd [#allocation4], %s124
      %s126 = sshll.u32 [#allocation5], 4
      %s127 = int_to_ptr.vmem [resolvable:$true] %s126
      %132 = dma.vmem_to_hbm [thread:$0]  %s127, 256, %s3, [#allocation4], 128, 128, 8
    $region21: #{tpu_custom_call.1} parent=1 // pred_fallthru
      _
    // Predicated region
    $region22: #{tpu_custom_call.1} parent=1 // pred_check
      _
    $region23: #{tpu_custom_call.1} parent=1 // pred_check_branch
      %134 = sbr.rel (0) target = $region25
    $region24: #{tpu_custom_call.1} parent=1 // pred_region
      _
    $region25: #{tpu_custom_call.1} parent=1 // pred_fallthru
      _
    // Predicated region
    $region26: #{tpu_custom_call.1} parent=1 // pred_check
      _
    $region27: #{tpu_custom_call.1} parent=1 // pred_check_branch
      %136 = sbr.rel (0) target = $region29
    $region28: #{tpu_custom_call.1} parent=1 // pred_region
      _
    $region29: #{tpu_custom_call.1} parent=1 // pred_fallthru
      _
    // Predicated region
    $region30: #{tpu_custom_call.1} parent=1 // pred_check
      _
    $region31: #{tpu_custom_call.1} parent=1 // pred_check_branch
      %138 = sbr.rel (0) target = $region33
    $region32: #{tpu_custom_call.1} parent=1 // pred_region
      %139 = dma.done [#allocation4], 256
    $region33: #{tpu_custom_call.1} parent=1 // pred_fallthru
      _
    // Predicated region
    $region34: #{tpu_custom_call.1} parent=1 // pred_check
      _
    $region35: #{tpu_custom_call.1} parent=1 // pred_check_branch
      %141 = sbr.rel (0) target = $region37
    $region36: #{tpu_custom_call.1} parent=1 // pred_region
      _
    $region37: #{tpu_custom_call.1} parent=1 // pred_fallthru
      _
    // Predicated region
    $region38: #{tpu_custom_call.1} parent=1 // pred_check
      _
    $region39: #{tpu_custom_call.1} parent=1 // pred_check_branch
      %143 = sbr.rel (0) target = $region41
    $region40: #{tpu_custom_call.1} parent=1 // pred_region
      _
    $region41: #{tpu_custom_call.1} parent=1 // pred_fallthru
      _
    %144 = vsyncpa [#allocation3], 1
    %145 = vsyncpa [#allocation4], 1

</llo_original>
